<compile_context>
chip_gen: v7x
topology: tpu7x:2x2x1
jax: 0.10.0
libtpu: 0.0.40
codegen_flags: <defaults>
</compile_context>

<pallas_src>
import functools

import jax
import jax.numpy as jnp
from jax.experimental import pallas as pl
from jax.experimental.pallas import tpu as pltpu


_DEFAULT_BLOCK_BYTES = 2 * 1024 * 1024  # ~2 MiB/block -> ~8 MiB live (2 in + 2 out buffers)


def _shift_next_replicate(x, axis):
    """y[..., i, ...] = x[..., min(i + 1, n - 1), ...] along `axis` (replicate edge)."""
    n = x.shape[axis]
    nxt = jax.lax.slice_in_dim(x, 1, n, axis=axis)
    edge = jax.lax.slice_in_dim(x, n - 1, n, axis=axis)
    return jnp.concatenate([nxt, edge], axis=axis)


def _maxpool_kernel(x_ref, o_ref, *, h_axis, w_axis):
    # One VMEM block; 2x2 / stride-1 max pool == two shift+max passes.
    x = x_ref[...]
    m = jnp.maximum(x, _shift_next_replicate(x, w_axis))           # max over the W pair
    o_ref[...] = jnp.maximum(m, _shift_next_replicate(m, h_axis))  # then over the H pair


def _pool_call(x, block_shape, index_map, grid, h_axis, w_axis):
    kernel = functools.partial(_maxpool_kernel, h_axis=h_axis, w_axis=w_axis)
    return pl.pallas_call(
        kernel,
        out_shape=jax.ShapeDtypeStruct(x.shape, x.dtype),
        grid_spec=pltpu.PrefetchScalarGridSpec(
            num_scalar_prefetch=0,
            grid=grid,
            in_specs=[pl.BlockSpec(block_shape, index_map)],
            out_specs=pl.BlockSpec(block_shape, index_map),
        ),
        compiler_params=pltpu.CompilerParams(
            dimension_semantics=("parallel", "parallel"),
            vmem_limit_bytes=32 * 1024 * 1024,
        ),
        cost_estimate=pl.CostEstimate(
            flops=3 * x.size,                              # 3 maxes per output element
            transcendentals=0,
            bytes_accessed=2 * x.size * x.dtype.itemsize,  # 1 read + 1 write, mem-bound
        ),
    )(x)


def _pick_tc_nhwc(c, plane_bytes, budget):
    """Channel tile for NHWC blocks (C is the lane axis):
    TC == C, or a multiple of 128 that divides C and fits the byte budget."""
    if c % 128 != 0 or c * plane_bytes <= budget:
        return c
    best = 128
    for cand in range(128, c, 128):
        if c % cand == 0 and cand * plane_bytes <= budget:
            best = cand
    return best


def _pick_tc_nchw(c, plane_bytes, budget):
    """Channel tile for NCHW blocks (C is a leading dim): any divisor of C."""
    best = 1
    for cand in range(1, c + 1):
        if c % cand == 0 and cand * plane_bytes <= budget:
            best = cand
    return best


def maxpool_stride1_nhwc(x_nhwc, *, max_block_bytes=_DEFAULT_BLOCK_BYTES):
    """x: (N, H, W, C) -> (N, H, W, C).  C on the lane axis (lane-dense when C >= 128)."""
    n, h, w, c = x_nhwc.shape
    tc = _pick_tc_nhwc(c, h * w * x_nhwc.dtype.itemsize, max_block_bytes)
    grid = (n, c // tc)
    return _pool_call(x_nhwc, (1, h, w, tc), lambda i, j: (i, 0, 0, j),
                      grid, h_axis=1, w_axis=2)


def _maxpool_nchw(x, *, max_block_bytes=_DEFAULT_BLOCK_BYTES):
    """x: (N, C, H, W) -> (N, C, H, W).  W on the lane axis (good when W >= C)."""
    n, c, h, w = x.shape
    tc = _pick_tc_nchw(c, h * w * x.dtype.itemsize, max_block_bytes)
    grid = (n, c // tc)
    return _pool_call(x, (1, tc, h, w), lambda i, j: (i, j, 0, 0),
                      grid, h_axis=2, w_axis=3)


def maxpool_stride1(x, *, max_block_bytes=_DEFAULT_BLOCK_BYTES):
    """Drop-in NCHW entry point matching the PyTorch module.

    Picks the layout whose lane (last-dim) axis is widest: channel-heavy maps
    (C >= W) run in NHWC so stores are unmasked full-lane vst; wide/shallow
    maps stay NCHW.  The NHWC path pays a layout round-trip only because the
    public API is NCHW; inside an NHWC model call `maxpool_stride1_nhwc`.
    """
    n, c, h, w = x.shape
    if c >= w:
        x_t = jnp.transpose(x, (0, 2, 3, 1))                     # NCHW -> NHWC
        y_t = maxpool_stride1_nhwc(x_t, max_block_bytes=max_block_bytes)
        return jnp.transpose(y_t, (0, 3, 1, 2))                  # NHWC -> NCHW
    return _maxpool_nchw(x, max_block_bytes=max_block_bytes)


def _reference_maxpool_stride1(x):
    # Pure-JAX reference: replicate-pad bottom/right by 1, then 2x2 window max.
    xp = jnp.pad(x, ((0, 0), (0, 0), (0, 1), (0, 1)), mode="edge")
    h, w = x.shape[-2], x.shape[-1]
    a = xp[:, :, :h, :w]
    b = xp[:, :, :h, 1:w + 1]
    c = xp[:, :, 1:h + 1, :w]
    d = xp[:, :, 1:h + 1, 1:w + 1]
    return jnp.maximum(jnp.maximum(a, b), jnp.maximum(c, d))


if __name__ == "__main__":
    key = jax.random.PRNGKey(0)
    k1, k2 = jax.random.split(key)

    # 1) Spec-sized test (small C, wide W -> NCHW path, W on lanes).
    x1 = jax.random.normal(k1, (2, 4, 16, 16), dtype=jnp.float32)
    y1 = jax.block_until_ready(maxpool_stride1(x1))
    assert y1.shape == x1.shape
    assert jnp.allclose(y1, _reference_maxpool_stride1(x1), atol=1e-6), "f32 mismatch"

    # 2) Channel-heavy bf16 test (C >= 128 -> NHWC path, C on lanes).
    x2 = jax.random.normal(k2, (1, 256, 16, 16), dtype=jnp.float32).astype(jnp.bfloat16)
    y2_ref = _reference_maxpool_stride1(x2)
    y2 = jax.block_until_ready(maxpool_stride1(x2))
    assert y2.shape == x2.shape
    assert jnp.array_equal(y2, y2_ref), "bf16 NHWC mismatch"

    # 3) Same input with a tiny block budget to exercise the channel-tiled
    #    multi-block grid (TC=128, grid C axis = 2).
    y3 = jax.block_until_ready(maxpool_stride1(x2, max_block_bytes=64 * 1024))
    assert jnp.array_equal(y3, y2_ref), "channel-tiled mismatch"

    print("KERNEL_OK")
</pallas_src>

<mosaic_0001>
module attributes {stable_mosaic.version = 11 : i64} {
  func.func @_maxpool_kernel(%arg0: i32, %arg1: i32, %arg2: memref<1x4x16x16xf32, #tpu.memory_space<vmem>>, %arg3: memref<1x4x16x16xf32, #tpu.memory_space<vmem>>) attributes {dimension_semantics = [#tpu.dimension_semantics<parallel>, #tpu.dimension_semantics<parallel>], iteration_bounds = array<i64: 2, 1>, scalar_prefetch = 0 : i64, scratch_operands = 0 : i64, tpu.core_type = #tpu.core_type<tc>, window_params = [{transform_indices = @transform_0, window_bounds = array<i64: 1, 4, 16, 16>}, {transform_indices = @transform_1, window_bounds = array<i64: 1, 4, 16, 16>}]} {
    %c0 = arith.constant 0 : index
    %c0_0 = arith.constant 0 : index
    %c0_1 = arith.constant 0 : index
    %c0_2 = arith.constant 0 : index
    %0 = vector.load %arg2[%c0, %c0_0, %c0_1, %c0_2] : memref<1x4x16x16xf32, #tpu.memory_space<vmem>>, vector<1x4x16x16xf32>
    %1 = vector.extract_strided_slice %0 {offsets = [0, 0, 0, 1], sizes = [1, 4, 16, 15], strides = [1, 1, 1, 1]} : vector<1x4x16x16xf32> to vector<1x4x16x15xf32>
    %2 = vector.extract_strided_slice %0 {offsets = [0, 0, 0, 15], sizes = [1, 4, 16, 1], strides = [1, 1, 1, 1]} : vector<1x4x16x16xf32> to vector<1x4x16x1xf32>
    %3 = tpu.concatenate %1, %2 in 3 : vector<1x4x16x15xf32>, vector<1x4x16x1xf32> -> vector<1x4x16x16xf32>
    %4 = arith.maximumf %0, %3 : vector<1x4x16x16xf32>
    %5 = vector.extract_strided_slice %4 {offsets = [0, 0, 1, 0], sizes = [1, 4, 15, 16], strides = [1, 1, 1, 1]} : vector<1x4x16x16xf32> to vector<1x4x15x16xf32>
    %6 = vector.extract_strided_slice %4 {offsets = [0, 0, 15, 0], sizes = [1, 4, 1, 16], strides = [1, 1, 1, 1]} : vector<1x4x16x16xf32> to vector<1x4x1x16xf32>
    %7 = tpu.concatenate %5, %6 in 2 : vector<1x4x15x16xf32>, vector<1x4x1x16xf32> -> vector<1x4x16x16xf32>
    %8 = arith.maximumf %4, %7 : vector<1x4x16x16xf32>
    %c0_3 = arith.constant 0 : index
    %c0_4 = arith.constant 0 : index
    %c0_5 = arith.constant 0 : index
    %c0_6 = arith.constant 0 : index
    %9 = vector.load %arg3[%c0_3, %c0_4, %c0_5, %c0_6] : memref<1x4x16x16xf32, #tpu.memory_space<vmem>>, vector<1x4x16x16xf32>
    tpu.vector_store %arg3[%c0_3, %c0_4, %c0_5, %c0_6], %8 {strides = array<i32>} : memref<1x4x16x16xf32, #tpu.memory_space<vmem>>, vector<1x4x16x16xf32>,
    return
  }
  func.func @transform_0(%arg0: i32, %arg1: i32) -> (i32, i32, i32, i32) {
    %c0_i32 = arith.constant 0 : i32
    %c0_i32_0 = arith.constant 0 : i32
    %c0_i32_1 = arith.constant 0 : i32
    return %arg0, %arg1, %c0_i32, %c0_i32_0 : i32, i32, i32, i32
  }
  func.func @transform_1(%arg0: i32, %arg1: i32) -> (i32, i32, i32, i32) {
    %c0_i32 = arith.constant 0 : i32
    %c0_i32_0 = arith.constant 0 : i32
    %c0_i32_1 = arith.constant 0 : i32
    return %arg0, %arg1, %c0_i32, %c0_i32_0 : i32, i32, i32, i32
  }
}

</mosaic_0001>

<llo_original>
// kernel: tpu_custom_call.1
$region0: #{tpu_custom_call.1}
  #allocation0 [shape = 'u32[]', space=smem, size = 0x4, offset = 0x4, fixed_abs, tag = 'smem constant byte address 0x4 - core index']
  #allocation1 [shape = 'u32[144,128]{1,0:T(1,128)}', space=vmem, size = 0x12000, scoped, tag = 'internal scratch']
  %s0 = inlined_call_operand.hbm [shape: f32[2,4,16,16], index: 0, kind: input, shape index: {}]
  %s1 = inlined_call_operand.hbm [shape: f32[2,4,16,16], index: 1, kind: output, shape index: {}]
  %s2 = sld [smem:[#allocation0]]
  $region41: #{tpu_custom_call.1} parent=0
    _
  %s4 = ssub.s32 1, %s2
  %s5 = scalar_select 0, %s4, %s2
  $region1: #{tpu_custom_call.1} parent=0
    #allocation2 [shape = 'u8[65536]{0}', space=vmem, size = 0x10000, scoped, tag = 'input window, operand 0']
    #allocation3 [shape = 's32[2]{0}', space=sflag, size = 0x8, scoped, tag = 'scoped memory for tpu_custom_call.1']
    #allocation4 [shape = 's32[2]{0}', space=sflag, size = 0x8, scoped, tag = 'scoped memory for tpu_custom_call.1']
    #allocation5 [shape = 'u8[65536]{0}', space=vmem, size = 0x10000, scoped, tag = 'output window, operand 0']
    %6 = vsyncpa [#allocation3], 0
    %s7 = scalar_lea.sflag [#allocation3], 1
    %8 = vsyncpa %s7, 0
    %9 = vsyncpa [#allocation4], 0
    %s10 = scalar_lea.sflag [#allocation4], 1
    %11 = vsyncpa %s10, 0
    loop: start=0, step=1, limit=4
    $region2: #{tpu_custom_call.1} parent=1 // loop_pre_header
      _
    $region3: #{tpu_custom_call.1} parent=1 // loop_header
      %s13 = sphi 0, %s17
      %p14 = scmp.ge.s32.totalorder %s13, 4
      %s20 = sphi 0, %s32
      %s21 = sphi 0, %s28
      %s22 = sphi 0, %s20
      %s23 = sphi 0, %s21
      %s24 = sphi 0, %s22
      %s25 = sphi 0, %s23
      %s37 = sphi 0, %s39
      %s40 = sphi 0, %s37
      %s41 = sphi 0, %s40
      %s57 = sphi 0, %s41
      %s65 = sphi 0, %s67
      %s68 = sphi 0, %s65
      %s69 = sphi 0, %s68
      %s85 = sphi 0, %s69
    $region4: #{tpu_custom_call.1} parent=1 // loop_header_branch
      %16 = sbr.rel (%p14) target = $region8
    $region5: #{tpu_custom_call.1} parent=1 // loop_body
      %s18 = ssub.s32 %s13, 1
      %s19 = ssub.s32 %s13, 2
      %s26 = sadd.s32 1, %s21
      %p27 = scmp.ge.s32.totalorder %s26, 1
      %s28 = scalar_select %p27, 0, %s26
      %s29 = sadd.s32 1, %s20
      %s30 = scalar_select %p27, %s29, %s20
      %p31 = scmp.ge.s32.totalorder %s30, 2
      %s32 = scalar_select %p31, 0, %s30
      %s33 = ssub.s32 %s20, %s32
      %s34 = ssub.s32 %s21, %s28
      %s35 = sor.u32 %s33, %s34
      %p36 = scmp.eq.s32.totalorder %s35, 0
      %s38 = sadd.s32 %s37, 1
      %s39 = scalar_select %p36, %s37, %s38
      %p42 = pneg %p36
      %p43 = scmp.eq.s32.totalorder %s13, 1
      %p44 = por %p42, %p43
      %p45 = scmp.ne.s32.totalorder %s37, %s40
      %p46 = scmp.eq.s32.totalorder %s13, 0
      %p47 = por %p45, %p46
      %p48 = scmp.ne.s32.totalorder %s37, %s40
      %p49 = scmp.eq.s32.totalorder %s18, 1
      %p50 = por %p48, %p49
      %p51 = scmp.ne.s32.totalorder %s40, %s41
      %p52 = scmp.eq.s32.totalorder %s18, 0
      %p53 = por %p51, %p52
      %p54 = scmp.ne.s32.totalorder %s40, %s41
      %p55 = scmp.eq.s32.totalorder %s19, 1
      %p56 = por %p54, %p55
      %p58 = scmp.ne.s32.totalorder %s41, %s57
      %p59 = scmp.eq.s32.totalorder %s19, 0
      %p60 = por %p58, %p59
      %s61 = ssub.s32 %s20, %s32
      %s62 = ssub.s32 %s21, %s28
      %s63 = sor.u32 %s61, %s62
      %p64 = scmp.eq.s32.totalorder %s63, 0
      %s66 = sadd.s32 %s65, 1
      %s67 = scalar_select %p64, %s65, %s66
      %p70 = pneg %p64
      %p71 = scmp.eq.s32.totalorder %s13, 1
      %p72 = por %p70, %p71
      %p73 = scmp.ne.s32.totalorder %s65, %s68
      %p74 = scmp.eq.s32.totalorder %s13, 0
      %p75 = por %p73, %p74
      %p76 = scmp.ne.s32.totalorder %s65, %s68
      %p77 = scmp.eq.s32.totalorder %s18, 1
      %p78 = por %p76, %p77
      %p79 = scmp.ne.s32.totalorder %s68, %s69
      %p80 = scmp.eq.s32.totalorder %s18, 0
      %p81 = por %p79, %p80
      %p82 = scmp.ne.s32.totalorder %s68, %s69
      %p83 = scmp.eq.s32.totalorder %s19, 1
      %p84 = por %p82, %p83
      %p86 = scmp.ne.s32.totalorder %s69, %s85
      %p87 = scmp.eq.s32.totalorder %s19, 0
      %p88 = por %p86, %p87
      %p89 = scmp.le.s32.totalorder 1, %s13
      %p90 = scmp.lt.s32.totalorder %s13, 3
      %p91 = pnand %p89, %p90
      %p92 = pneg %p91
      // Predicated region
      $region9: #{tpu_custom_call.1} parent=5 // pred_check
        _
      $region10: #{tpu_custom_call.1} parent=5 // pred_check_branch
        %94 = sbr.rel (%p91) target = $region12
      $region11: #{tpu_custom_call.1} parent=5 // pred_region
        %s95 = ssub.s32 %s13, 1
      $region12: #{tpu_custom_call.1} parent=5 // pred_fallthru
        _
      %p96 = scmp.lt.s32.totalorder %s13, 2
      // Predicated region
      $region13: #{tpu_custom_call.1} parent=5 // pred_check
        %p97 = pneg %p96
      $region14: #{tpu_custom_call.1} parent=5 // pred_check_branch
        %99 = sbr.rel (%p97) target = $region16
      $region15: #{tpu_custom_call.1} parent=5 // pred_region
        // Predicated region
        $region17: #{tpu_custom_call.1} parent=15 // pred_check
          %p100 = pneg %p47
        $region18: #{tpu_custom_call.1} parent=15 // pred_check_branch
          %102 = sbr.rel (%p100) target = $region20
        $region19: #{tpu_custom_call.1} parent=15 // pred_region
          %s103 = sand.u32 %s37, 1
          %s104 = scalar_lea.sflag [#allocation3], %s103
          %s105 = sand.u32 %s37, 1
          %s106 = smul.addr %s105, 64
          %s107 = scalar_lea.vmem [#allocation2], %s106
          %s108 = smul.u32 4, %s21
          %s110 = ssub.s32 1024, 1024
          %111 = vsyncadd %s104, %s110
          %s112 = smul.addr %s108, 2
          %s113 = smul.addr %s20, 8
          %s114 = sadd.s32 %s112, %s113
          %s115 = smul.addr %s114, 128
          %s116 = scalar_lea.hbm %s0, %s115
          %s117 = sshll.u32 %s107, 4
          %s118 = int_to_ptr.vmem [resolvable:$true] %s117
          %123 = dma.hbm_to_vmem [thread:$0]  %s116, 1024, %s118, %s104, 128, 128, 8
        $region20: #{tpu_custom_call.1} parent=15 // pred_fallthru
          _
      $region16: #{tpu_custom_call.1} parent=5 // pred_fallthru
        _
      %p124 = scmp.le.s32.totalorder 1, %s13
      %p125 = scmp.lt.s32.totalorder %s13, 3
      %p126 = pnand %p124, %p125
      %p127 = pneg %p126
      // Predicated region
      $region21: #{tpu_custom_call.1} parent=5 // pred_check
        _
      $region22: #{tpu_custom_call.1} parent=5 // pred_check_branch
        %129 = sbr.rel (%p126) target = $region24
      $region23: #{tpu_custom_call.1} parent=5 // pred_region
        %s130 = ssub.s32 %s13, 1
        %s131 = sand.u32 %s40, 1
        %s132 = scalar_lea.sflag [#allocation3], %s131
        %s133 = sand.u32 %s40, 1
        %s134 = smul.addr %s133, 64
        %s135 = scalar_lea.vmem [#allocation2], %s134
        // Predicated region
        $region25: #{tpu_custom_call.1} parent=23 // pred_check
          %p136 = pneg %p53
        $region26: #{tpu_custom_call.1} parent=23 // pred_check_branch
          %138 = sbr.rel (%p136) target = $region28
        $region27: #{tpu_custom_call.1} parent=23 // pred_region
          %139 = dma.done %s132, 1024
        $region28: #{tpu_custom_call.1} parent=23 // pred_fallthru
          _
        %s140 = sand.u32 %s40, 1
        %s141 = scalar_lea.sflag [#allocation3], %s140
        %s142 = sand.u32 %s40, 1
        %s143 = smul.addr %s142, 64
        %s144 = scalar_lea.vmem [#allocation2], %s143
        %p145 = pneg %p53
        %p146 = pneg %p50
        %p147 = pneg %p81
        %p148 = pneg %p78
        %s149 = sand.u32 %s68, 1
        %s150 = scalar_lea.sflag [#allocation4], %s149
        %s151 = sand.u32 %s68, 1
        %s152 = smul.addr %s151, 64
        %s153 = scalar_lea.vmem [#allocation5], %s152
        %s154 = smul.u32 4, %s23
        %s155 = smul.u32 4, %s23
        %v156 = vld [vmem:[%s135] sm:$0xff]
        %v157 = vld [vmem:[%s135 + $0x8] sm:$0xff]
        %v158 = vld [vmem:[%s135 + $0x10] sm:$0xff]
        %v159 = vld [vmem:[%s135 + $0x18] sm:$0xff]
        %v160 = vld [vmem:[%s135 + $0x20] sm:$0xff]
        %v161 = vld [vmem:[%s135 + $0x28] sm:$0xff]
        %v162 = vld [vmem:[%s135 + $0x30] sm:$0xff]
        %v163 = vld [vmem:[%s135 + $0x38] sm:$0xff]
        %172 = vrot.lane.b32.xlu0 %v156, 127
        %v173 = vpop.permute.xlu0 %172
        %174 = vrot.lane.b32.xlu0 %v157, 127
        %v175 = vpop.permute.xlu0 %174
        %176 = vrot.lane.b32.xlu0 %v158, 127
        %v177 = vpop.permute.xlu0 %176
        %178 = vrot.lane.b32.xlu0 %v159, 127
        %v179 = vpop.permute.xlu0 %178
        %180 = vrot.lane.b32.xlu0 %v160, 127
        %v181 = vpop.permute.xlu0 %180
        %182 = vrot.lane.b32.xlu0 %v161, 127
        %v183 = vpop.permute.xlu0 %182
        %184 = vrot.lane.b32.xlu0 %v162, 127
        %v185 = vpop.permute.xlu0 %184
        %186 = vrot.lane.b32.xlu0 %v163, 127
        %v187 = vpop.permute.xlu0 %186
        %vm196 = vcmask 121856
        %v197 = vsel %vm196, %v173, %v156
        %v198 = vsel %vm196, %v175, %v157
        %v199 = vsel %vm196, %v177, %v158
        %v200 = vsel %vm196, %v179, %v159
        %v201 = vsel %vm196, %v181, %v160
        %v202 = vsel %vm196, %v183, %v161
        %v203 = vsel %vm196, %v185, %v162
        %v204 = vsel %vm196, %v187, %v163
        %v205 = vmax.f32 %v156, %v197
        %v206 = vmax.f32 %v157, %v198
        %v207 = vmax.f32 %v158, %v199
        %v208 = vmax.f32 %v159, %v200
        %v209 = vmax.f32 %v160, %v201
        %v210 = vmax.f32 %v161, %v202
        %v211 = vmax.f32 %v162, %v203
        %v212 = vmax.f32 %v163, %v204
        %vm221 = vcmask 1046528
        %v222 = vrot.slane %v205, 1
        %v223 = vrot.slane %v206, 1
        %v224 = vsel %vm221, %v222, %v223
        %v225 = vrot.slane %v207, 1
        %v226 = vrot.slane %v208, 1
        %v227 = vsel %vm221, %v225, %v226
        %v228 = vrot.slane %v209, 1
        %v229 = vrot.slane %v210, 1
        %v230 = vsel %vm221, %v228, %v229
        %v231 = vrot.slane %v211, 1
        %v232 = vrot.slane %v212, 1
        %v233 = vsel %vm221, %v231, %v232
        %v242 = vsel %vm221, %v223, %v206
        %v243 = vsel %vm221, %v226, %v208
        %v244 = vsel %vm221, %v229, %v210
        %v245 = vsel %vm221, %v232, %v212
        %v246 = vmax.f32 %v205, %v224
        %v247 = vmax.f32 %v206, %v242
        %v248 = vmax.f32 %v207, %v227
        %v249 = vmax.f32 %v208, %v243
        %v250 = vmax.f32 %v209, %v230
        %v251 = vmax.f32 %v210, %v244
        %v252 = vmax.f32 %v211, %v233
        %v253 = vmax.f32 %v212, %v245
        %vm254 = vcmask 130048
        %255 = vst.msk [vmem:[%s153] sm:$0xff] %vm254, %v246
        %256 = vst.msk [vmem:[%s153 + $0x8] sm:$0xff] %vm254, %v247
        %257 = vst.msk [vmem:[%s153 + $0x10] sm:$0xff] %vm254, %v248
        %258 = vst.msk [vmem:[%s153 + $0x18] sm:$0xff] %vm254, %v249
        %259 = vst.msk [vmem:[%s153 + $0x20] sm:$0xff] %vm254, %v250
        %260 = vst.msk [vmem:[%s153 + $0x28] sm:$0xff] %vm254, %v251
        %261 = vst.msk [vmem:[%s153 + $0x30] sm:$0xff] %vm254, %v252
        %262 = vst.msk [vmem:[%s153 + $0x38] sm:$0xff] %vm254, %v253
        %s263 = sand.u32 %s68, 1
        %s264 = scalar_lea.sflag [#allocation4], %s263
        %s265 = sand.u32 %s68, 1
        %s266 = smul.addr %s265, 64
        %s267 = scalar_lea.vmem [#allocation5], %s266
        // Predicated region
        $region29: #{tpu_custom_call.1} parent=23 // pred_check
          %p268 = pneg %p78
        $region30: #{tpu_custom_call.1} parent=23 // pred_check_branch
          %270 = sbr.rel (%p268) target = $region32
        $region31: #{tpu_custom_call.1} parent=23 // pred_region
          %s271 = smul.u32 4, %s23
          %s273 = ssub.s32 1024, 1024
          %274 = vsyncadd %s264, %s273
          %s275 = smul.addr %s271, 2
          %s276 = smul.addr %s22, 8
          %s277 = sadd.s32 %s275, %s276
          %s278 = smul.addr %s277, 128
          %s279 = scalar_lea.hbm %s1, %s278
          %s280 = sshll.u32 %s267, 4
          %s281 = int_to_ptr.vmem [resolvable:$true] %s280
          %286 = dma.vmem_to_hbm [thread:$0]  %s281, 1024, %s279, %s264, 128, 128, 8
        $region32: #{tpu_custom_call.1} parent=23 // pred_fallthru
          _
      $region24: #{tpu_custom_call.1} parent=5 // pred_fallthru
        _
      %p287 = scmp.le.s32.totalorder 2, %s13
      // Predicated region
      $region33: #{tpu_custom_call.1} parent=5 // pred_check
        %p288 = pneg %p287
      $region34: #{tpu_custom_call.1} parent=5 // pred_check_branch
        %290 = sbr.rel (%p288) target = $region36
      $region35: #{tpu_custom_call.1} parent=5 // pred_region
        %s291 = ssub.s32 %s13, 2
        // Predicated region
        $region37: #{tpu_custom_call.1} parent=35 // pred_check
          %p292 = pneg %p84
        $region38: #{tpu_custom_call.1} parent=35 // pred_check_branch
          %294 = sbr.rel (%p292) target = $region40
        $region39: #{tpu_custom_call.1} parent=35 // pred_region
          %s295 = sand.u32 %s69, 1
          %s296 = scalar_lea.sflag [#allocation4], %s295
          %s297 = sand.u32 %s69, 1
          %s298 = smul.addr %s297, 64
          %s299 = scalar_lea.vmem [#allocation5], %s298
          %300 = dma.done %s296, 1024
        $region40: #{tpu_custom_call.1} parent=35 // pred_fallthru
          _
      $region36: #{tpu_custom_call.1} parent=5 // pred_fallthru
        _
    $region6: #{tpu_custom_call.1} parent=1 // loop_footer
      %s17 = sadd.s32 1, %s13
    $region7: #{tpu_custom_call.1} parent=1 // loop_footer_branch
      %12 = sbr.rel target = $region3
    $region8: #{tpu_custom_call.1} parent=1 // loop_exit
      _
    %301 = vsyncpa [#allocation3], 1
    %s302 = scalar_lea.sflag [#allocation3], 1
    %303 = vsyncpa %s302, 1
    %304 = vsyncpa [#allocation4], 1
    %s305 = scalar_lea.sflag [#allocation4], 1
    %306 = vsyncpa %s305, 1

</llo_original>
